<compile_context>
chip_gen: v7x
topology: tpu7x:2x2x1
jax: 0.10.0
libtpu: 0.0.40
codegen_flags: <defaults>
</compile_context>

<pallas_src>
import functools

import jax
import jax.numpy as jnp
from jax.experimental import pallas as pl
from jax.experimental.pallas import tpu as pltpu


# --------------------------------------------------------------------------
# Sizing helpers (trace-time Python; generation-aware).
# --------------------------------------------------------------------------
def _vmem_budget_bytes():
    """~75% of physical VMEM (96 MiB on v5e/v6e, 48 MiB on v7x)."""
    cap = 64 * 1024 * 1024
    try:
        info = pltpu.get_tpu_info()
        got = getattr(info, "vmem_capacity_bytes", None)
        if got:
            cap = int(got)
    except Exception:
        pass
    return int(cap) * 3 // 4


def _divisors(n):
    ds = set()
    i = 1
    while i * i <= n:
        if n % i == 0:
            ds.add(i)
            ds.add(n // i)
        i += 1
    return sorted(ds)


def _fused_batch_tile(b, c, cr, hw, itemsize, vmem_budget):
    """Largest divisor tb of b whose fused working set fits the VMEM budget.

    Returns 0 if even tb == 1 does not fit (caller falls back to two passes).
    Working set per batch row (conservative): input block + output block, each
    double-buffered (4x), an f32 copy for the pooling path, and the (C, C//r)
    excitation intermediate.  Weights counted double-buffered.
    """
    io = c * hw * itemsize
    f32_tmp = c * hw * 4 + 2 * c * cr * 4
    w_bytes = 2 * (2 * c * cr * 4)
    slack = 2 * 1024 * 1024
    # Cap the x block size so very large batches still get >1 grid step.
    block_cap = max(io, vmem_budget // 6)
    best = 0
    for tb in _divisors(b):
        need = tb * (4 * io + f32_tmp) + w_bytes + slack
        if need <= vmem_budget and tb * io <= block_cap:
            best = max(best, tb)
    return best


def _pick_c_tile(c, hw, itemsize, max_block_bytes):
    """Channel tile for the fallback passes: a divisor of C that is a multiple
    of 8 (or C itself), as large as possible under the block-byte target."""
    row_bytes = hw * max(itemsize, 4)
    cap = max(1, max_block_bytes // max(1, row_bytes))
    best = None
    for tc in _divisors(c):
        if tc != c and tc % 8 != 0:
            continue  # keep the second-minor block dim (8, *)-legal
        if tc <= cap and (best is None or tc > best):
            best = tc
    if best is None:
        legal = [d for d in _divisors(c) if d % 8 == 0 or d == c]
        best = min(legal)
    return best


# --------------------------------------------------------------------------
# Fused kernel: pool -> excitation MLP -> sigmoid gate -> scale, one pass.
#   x_ref / o_ref : (TB, C, HW)     w1_ref : (C, Cr) = fc1_w.T
#   w2_ref        : (C, Cr) = fc2_w
# --------------------------------------------------------------------------
def _fused_kernel(x_ref, w1_ref, w2_ref, o_ref, *, inv_hw):
    x = x_ref[...]
    # Global average pool over the lane (HW) axis, f32 accumulation.
    pooled = jnp.sum(x.astype(jnp.float32), axis=-1, keepdims=True) * inv_hw  # (TB,C,1)
    # hid[b, j] = relu( sum_c pooled[b, c] * fc1_w[j, c] )     (sublane reduce)
    hid = jnp.maximum(
        jnp.sum(pooled * w1_ref[...][None, :, :], axis=1, keepdims=True), 0.0)  # (TB,1,Cr)
    # gate[b, c] = sigmoid( sum_j hid[b, j] * fc2_w[c, j] )    (lane reduce)
    gate = jax.nn.sigmoid(
        jnp.sum(hid * w2_ref[...][None, :, :], axis=-1, keepdims=True))         # (TB,C,1)
    # Scale in the input dtype (bf16 stays bf16 on v6e/v7x; no-op for f32).
    o_ref[...] = x * gate.astype(x.dtype)


# --------------------------------------------------------------------------
# Fallback pass 1: per-(b, channel-block) global average pool. No scratch,
# no sequential reduction axis; the whole HW extent is the lane axis.
# --------------------------------------------------------------------------
def _pool_kernel(x_ref, pooled_ref, *, inv_hw):
    pooled_ref[...] = (
        jnp.sum(x_ref[...].astype(jnp.float32), axis=-1, keepdims=True) * inv_hw)


# --------------------------------------------------------------------------
# Fallback pass 2: scale x by the precomputed per-(b, c) gate.
# --------------------------------------------------------------------------
def _scale_kernel(x_ref, gate_ref, o_ref):
    o_ref[...] = x_ref[...] * gate_ref[...]


# --------------------------------------------------------------------------
# Wrapper.
#   x_nchw : (B, C, H, W)
#   fc1_w  : (C//r, C)  == PyTorch fc[0].weight
#   fc2_w  : (C, C//r)  == PyTorch fc[2].weight
# --------------------------------------------------------------------------
def _se_layer_impl(x_nchw, fc1_w, fc2_w):
    b, c, h, w = x_nchw.shape
    cr = fc1_w.shape[0]
    hw = h * w
    x_flat = x_nchw.reshape(b, c, hw)            # free reshape for NCHW input
    w1k = fc1_w.T                                # (C, Cr)
    w2k = fc2_w                                  # (C, Cr)

    itemsize = x_flat.dtype.itemsize
    x_bytes = b * c * hw * itemsize
    vmem_budget = _vmem_budget_bytes()

    # ------------------------ fused single-pass path ------------------------
    tb = _fused_batch_tile(b, c, cr, hw, itemsize, vmem_budget)
    if tb:
        out_flat = pl.pallas_call(
            functools.partial(_fused_kernel, inv_hw=1.0 / float(hw)),
            out_shape=jax.ShapeDtypeStruct((b, c, hw), x_flat.dtype),
            grid_spec=pltpu.PrefetchScalarGridSpec(
                num_scalar_prefetch=0,
                grid=(b // tb,),
                in_specs=[
                    pl.BlockSpec((tb, c, hw), lambda i: (i, 0, 0)),
                    pl.BlockSpec((c, cr), lambda i: (0, 0)),
                    pl.BlockSpec((c, cr), lambda i: (0, 0)),
                ],
                out_specs=pl.BlockSpec((tb, c, hw), lambda i: (i, 0, 0)),
            ),
            compiler_params=pltpu.CompilerParams(
                dimension_semantics=("parallel",),
                vmem_limit_bytes=vmem_budget,
            ),
            cost_estimate=pl.CostEstimate(
                flops=2 * b * c * hw + 4 * b * c * cr,
                transcendentals=b * c,
                bytes_accessed=2 * x_bytes + 4 * c * cr * 4,
            ),
        )(x_flat, w1k, w2k)
        return out_flat.reshape(b, c, h, w)

    # ------------------ fallback: two passes, channel-tiled -----------------
    tc = _pick_c_tile(c, hw, itemsize, vmem_budget // 8)
    n_c = c // tc
    grid = (b, n_c)

    pooled3 = pl.pallas_call(
        functools.partial(_pool_kernel, inv_hw=1.0 / float(hw)),
        out_shape=jax.ShapeDtypeStruct((b, c, 1), jnp.float32),
        grid_spec=pltpu.PrefetchScalarGridSpec(
            num_scalar_prefetch=0,
            grid=grid,
            in_specs=[pl.BlockSpec((1, tc, hw), lambda bi, ci: (bi, ci, 0))],
            out_specs=pl.BlockSpec((1, tc, 1), lambda bi, ci: (bi, ci, 0)),
        ),
        compiler_params=pltpu.CompilerParams(
            dimension_semantics=("parallel", "parallel"),
            vmem_limit_bytes=vmem_budget,
        ),
        cost_estimate=pl.CostEstimate(
            flops=b * c * hw, transcendentals=0,
            bytes_accessed=x_bytes + b * c * 4),
    )(x_flat)

    # Tiny excitation MLP in XLA (B large enough here that the MXU matmul is
    # worthwhile; negligible FLOPs either way).
    pooled = pooled3[:, :, 0]                                         # (B, C)
    hid = jnp.maximum(jnp.dot(pooled, w1k,
                              preferred_element_type=jnp.float32), 0.0)
    gate = jax.nn.sigmoid(jnp.dot(hid, w2k.T,
                                  preferred_element_type=jnp.float32))
    gate3 = gate.astype(x_flat.dtype)[:, :, None]                     # (B, C, 1)

    out_flat = pl.pallas_call(
        _scale_kernel,
        out_shape=jax.ShapeDtypeStruct((b, c, hw), x_flat.dtype),
        grid_spec=pltpu.PrefetchScalarGridSpec(
            num_scalar_prefetch=0,
            grid=grid,
            in_specs=[
                pl.BlockSpec((1, tc, hw), lambda bi, ci: (bi, ci, 0)),
                pl.BlockSpec((1, tc, 1), lambda bi, ci: (bi, ci, 0)),
            ],
            out_specs=pl.BlockSpec((1, tc, hw), lambda bi, ci: (bi, ci, 0)),
        ),
        compiler_params=pltpu.CompilerParams(
            dimension_semantics=("parallel", "parallel"),
            vmem_limit_bytes=vmem_budget,
        ),
        cost_estimate=pl.CostEstimate(
            flops=b * c * hw, transcendentals=0,
            bytes_accessed=2 * x_bytes + b * c * itemsize),
    )(x_flat, gate3)

    return out_flat.reshape(b, c, h, w)


se_layer = jax.jit(_se_layer_impl)


if __name__ == "__main__":
    B, C, H, W = 2, 4, 16, 16
    reduction = 2
    Cr = C // reduction

    key = jax.random.PRNGKey(0)
    kx, k1, k2 = jax.random.split(key, 3)

    x = jax.random.normal(kx, (B, C, H, W), dtype=jnp.float32)
    # Weights in PyTorch nn.Linear layout (out_features, in_features), bias-free.
    fc1_w = jax.random.normal(k1, (Cr, C), dtype=jnp.float32) * (1.0 / C ** 0.5)
    fc2_w = jax.random.normal(k2, (C, Cr), dtype=jnp.float32) * (1.0 / Cr ** 0.5)

    out = se_layer(x, fc1_w, fc2_w)
    jax.block_until_ready(out)

    # Reference in plain JAX, same math as the PyTorch module (bias=False).
    pooled = x.mean(axis=(2, 3))                                       # (B, C)
    y = jax.nn.sigmoid(jnp.maximum(pooled @ fc1_w.T, 0.0) @ fc2_w.T)   # (B, C)
    ref = x * y[:, :, None, None]
    assert jnp.allclose(out, ref, atol=1e-5, rtol=1e-5), "mismatch vs reference"

    print("KERNEL_OK")
</pallas_src>

<mosaic_0001>
module attributes {stable_mosaic.version = 11 : i64} {
  func.func @_fused_kernel(%arg0: i32, %arg1: memref<2x4x256xf32, #tpu.memory_space<vmem>>, %arg2: memref<4x2xf32, #tpu.memory_space<vmem>>, %arg3: memref<4x2xf32, #tpu.memory_space<vmem>>, %arg4: memref<2x4x256xf32, #tpu.memory_space<vmem>>) attributes {dimension_semantics = [#tpu.dimension_semantics<parallel>], iteration_bounds = array<i64: 1>, scalar_prefetch = 0 : i64, scratch_operands = 0 : i64, tpu.core_type = #tpu.core_type<tc>, window_params = [{transform_indices = @transform_0, window_bounds = array<i64: 2, 4, 256>}, {pipeline_mode = #tpu.pipeline_mode<synchronous>, transform_indices = @transform_1, window_bounds = array<i64: 4, 2>}, {pipeline_mode = #tpu.pipeline_mode<synchronous>, transform_indices = @transform_2, window_bounds = array<i64: 4, 2>}, {transform_indices = @transform_3, window_bounds = array<i64: 2, 4, 256>}]} {
    %c0 = arith.constant 0 : index
    %c0_0 = arith.constant 0 : index
    %c0_1 = arith.constant 0 : index
    %0 = vector.load %arg1[%c0, %c0_0, %c0_1] : memref<2x4x256xf32, #tpu.memory_space<vmem>>, vector<2x4x256xf32>
    %cst = arith.constant dense<0.000000e+00> : vector<2x4xf32>
    %1 = vector.multi_reduction <add>, %0, %cst [2] : vector<2x4x256xf32> to vector<2x4xf32>
    %2 = vector.shape_cast %1 : vector<2x4xf32> to vector<2x4x1xf32>
    %cst_2 = arith.constant 3.906250e-03 : f32
    %3 = vector.broadcast %cst_2 : f32 to vector<2x4x1xf32>
    %4 = arith.mulf %2, %3 : vector<2x4x1xf32>
    %c0_3 = arith.constant 0 : index
    %c0_4 = arith.constant 0 : index
    %5 = vector.load %arg2[%c0_3, %c0_4] : memref<4x2xf32, #tpu.memory_space<vmem>>, vector<4x2xf32>
    %6 = vector.shape_cast %5 : vector<4x2xf32> to vector<1x4x2xf32>
    %7 = vector.broadcast %4 : vector<2x4x1xf32> to vector<2x4x2xf32>
    %8 = vector.broadcast %6 : vector<1x4x2xf32> to vector<2x4x2xf32>
    %9 = arith.mulf %7, %8 : vector<2x4x2xf32>
    %cst_5 = arith.constant dense<0.000000e+00> : vector<2x2xf32>
    %10 = vector.multi_reduction <add>, %9, %cst_5 [1] : vector<2x4x2xf32> to vector<2x2xf32>
    %11 = vector.shape_cast %10 : vector<2x2xf32> to vector<2x1x2xf32>
    %cst_6 = arith.constant 0.000000e+00 : f32
    %12 = vector.broadcast %cst_6 : f32 to vector<2x1x2xf32>
    %13 = arith.maximumf %11, %12 : vector<2x1x2xf32>
    %c0_7 = arith.constant 0 : index
    %c0_8 = arith.constant 0 : index
    %14 = vector.load %arg3[%c0_7, %c0_8] : memref<4x2xf32, #tpu.memory_space<vmem>>, vector<4x2xf32>
    %15 = vector.shape_cast %14 : vector<4x2xf32> to vector<1x4x2xf32>
    %16 = vector.broadcast %13 : vector<2x1x2xf32> to vector<2x4x2xf32>
    %17 = vector.broadcast %15 : vector<1x4x2xf32> to vector<2x4x2xf32>
    %18 = arith.mulf %16, %17 : vector<2x4x2xf32>
    %cst_9 = arith.constant dense<0.000000e+00> : vector<2x4xf32>
    %19 = vector.multi_reduction <add>, %18, %cst_9 [2] : vector<2x4x2xf32> to vector<2x4xf32>
    %20 = vector.shape_cast %19 : vector<2x4xf32> to vector<2x4x1xf32>
    %21 = arith.negf %20 : vector<2x4x1xf32>
    %22 = math.exp %21 : vector<2x4x1xf32>
    %cst_10 = arith.constant 1.000000e+00 : f32
    %23 = vector.broadcast %cst_10 : f32 to vector<2x4x1xf32>
    %24 = arith.addf %23, %22 : vector<2x4x1xf32>
    %25 = arith.divf %23, %24 : vector<2x4x1xf32>
    %26 = vector.broadcast %25 : vector<2x4x1xf32> to vector<2x4x256xf32>
    %27 = arith.mulf %0, %26 : vector<2x4x256xf32>
    %c0_11 = arith.constant 0 : index
    %c0_12 = arith.constant 0 : index
    %c0_13 = arith.constant 0 : index
    %28 = vector.load %arg4[%c0_11, %c0_12, %c0_13] : memref<2x4x256xf32, #tpu.memory_space<vmem>>, vector<2x4x256xf32>
    tpu.vector_store %arg4[%c0_11, %c0_12, %c0_13], %27 {strides = array<i32>} : memref<2x4x256xf32, #tpu.memory_space<vmem>>, vector<2x4x256xf32>,
    return
  }
  func.func @transform_0(%arg0: i32) -> (i32, i32, i32) {
    %c0_i32 = arith.constant 0 : i32
    %c0_i32_0 = arith.constant 0 : i32
    %c0_i32_1 = arith.constant 0 : i32
    return %arg0, %c0_i32, %c0_i32_0 : i32, i32, i32
  }
  func.func @transform_1(%arg0: i32) -> (i32, i32) {
    %c0_i32 = arith.constant 0 : i32
    %c0_i32_0 = arith.constant 0 : i32
    %c0_i32_1 = arith.constant 0 : i32
    return %c0_i32, %c0_i32_0 : i32, i32
  }
  func.func @transform_2(%arg0: i32) -> (i32, i32) {
    %c0_i32 = arith.constant 0 : i32
    %c0_i32_0 = arith.constant 0 : i32
    %c0_i32_1 = arith.constant 0 : i32
    return %c0_i32, %c0_i32_0 : i32, i32
  }
  func.func @transform_3(%arg0: i32) -> (i32, i32, i32) {
    %c0_i32 = arith.constant 0 : i32
    %c0_i32_0 = arith.constant 0 : i32
    %c0_i32_1 = arith.constant 0 : i32
    return %arg0, %c0_i32, %c0_i32_0 : i32, i32, i32
  }
}

</mosaic_0001>

<llo_original>
// kernel: _se_layer_impl.1
$region0: #{_se_layer_impl.1}
  #allocation0 [shape = 'u32[]', space=smem, size = 0x4, offset = 0x4, fixed_abs, tag = 'smem constant byte address 0x4 - core index']
  #allocation1 [shape = 'u32[144,128]{1,0:T(1,128)}', space=vmem, size = 0x12000, scoped, tag = 'internal scratch']
  %s0 = inlined_call_operand.vmem [shape: f32[2,4,256], index: 0, kind: input, shape index: {}]
  %s1 = inlined_call_operand.vmem [shape: f32[4,2], index: 1, kind: input, shape index: {}]
  %s2 = inlined_call_operand.vmem [shape: f32[4,2], index: 2, kind: input, shape index: {}]
  %s3 = inlined_call_operand.vmem [shape: f32[2,4,256], index: 3, kind: output, shape index: {}]
  %s4 = sld [smem:[#allocation0]]
  $region22: #{_se_layer_impl.1} parent=0
    _
  %s6 = ssub.s32 1, %s4
  %s7 = scalar_select 0, %s6, %s4
  // Predicated region
  $region2: #{_se_layer_impl.1} parent=0 // pred_check
    _
  $region3: #{_se_layer_impl.1} parent=0 // pred_check_branch
    %9 = sbr.rel (0) target = $region5
  $region4: #{_se_layer_impl.1} parent=0 // pred_region
    _
  $region5: #{_se_layer_impl.1} parent=0 // pred_fallthru
    _
  // Predicated region
  $region6: #{_se_layer_impl.1} parent=0 // pred_check
    _
  $region7: #{_se_layer_impl.1} parent=0 // pred_check_branch
    %11 = sbr.rel (0) target = $region9
  $region8: #{_se_layer_impl.1} parent=0 // pred_region
    _
  $region9: #{_se_layer_impl.1} parent=0 // pred_fallthru
    _
  // Predicated region
  $region10: #{_se_layer_impl.1} parent=0 // pred_check
    _
  $region11: #{_se_layer_impl.1} parent=0 // pred_check_branch
    %13 = sbr.rel (0) target = $region13
  $region12: #{_se_layer_impl.1} parent=0 // pred_region
    _
  $region13: #{_se_layer_impl.1} parent=0 // pred_fallthru
    _
  %v14 = vld [vmem:[%s0] sm:$0xff]
  %v15 = vld [vmem:[%s0 + $0x8] sm:$0xff]
  %v18 = vcombine.high %v14, %v14
  %v19 = vcombine.high %v15, %v15
  %vm22 = vcmask 1043456
  %v23 = vsel %vm22, %v14, 0.0
  %v24 = vsel %vm22, %v18, 0.0
  %v25 = vadd.f32 %v23, %v24
  %26 = vadd.xlane.f32.xlu0 %v25
  %v27 = vpop.xlane.xlu0 %26
  %v28 = vsel %vm22, %v15, 0.0
  %v29 = vsel %vm22, %v19, 0.0
  %v30 = vadd.f32 %v28, %v29
  %31 = vadd.xlane.f32.xlu0 %v30
  %v32 = vpop.xlane.xlu0 %31
  %v33 = vmul.f32 %v27, 0.00390625
  %v34 = vmul.f32 %v32, 0.00390625
  %v35 = vld [vmem:[%s1] sm:$0xf]
  %v36 = vmul.f32 %v33, %v35
  %v37 = vmul.f32 %v34, %v35
  %vm38 = vcmask 11264
  %v39 = vsel %vm38, %v36, 0.0
  %v40 = vrot.slane %v39, 4
  %v41 = vadd.f32 %v39, %v40
  %v42 = vrot.slane %v41, 2
  %v43 = vadd.f32 %v41, %v42
  %v44 = vrot.slane %v43, 1
  %v45 = vadd.f32 %v43, %v44
  %v46 = vsel %vm38, %v37, 0.0
  %v47 = vrot.slane %v46, 4
  %v48 = vadd.f32 %v46, %v47
  %v49 = vrot.slane %v48, 2
  %v50 = vadd.f32 %v48, %v49
  %v51 = vrot.slane %v50, 1
  %v52 = vadd.f32 %v50, %v51
  %v53 = vmax.f32 %v45, 0.0
  %v54 = vmax.f32 %v52, 0.0
  %v55 = vld [vmem:[%s2] sm:$0xf]
  %v56 = vmul.f32 %v53, %v55
  %v57 = vmul.f32 %v54, %v55
  %v58 = vsel %vm38, %v56, 0.0
  %59 = vadd.xlane.f32.xlu0 %v58
  %v60 = vpop.xlane.xlu0 %59
  %v61 = vsel %vm38, %v57, 0.0
  %62 = vadd.xlane.f32.xlu0 %v61
  %v63 = vpop.xlane.xlu0 %62
  %v64 = vxor.u32 %v60, 2147483648
  %v65 = vxor.u32 %v63, 2147483648
  %v66 = vmul.f32 %v64, 1.442695
  %v67 = vpow.pop %v66
  %v68 = vmul.f32 %v65, 1.442695
  %v69 = vpow.pop %v68
  %v70 = vadd.f32 %v67, 1.0
  %v71 = vadd.f32 %v69, 1.0
  %v72 = vrcp.pop %v70
  %v73 = vmul.f32 1.0, %v72
  %v74 = vrcp.pop %v71
  %v75 = vmul.f32 1.0, %v74
  %v79 = vunpack.c.l.s4 839922192
  %v80 = vunpack.c.0.s8 %v79
  %v81 = vlaneseq
  %v82 = vshrl.u32 %v81, 7
  %v83 = vsub.s32 %v80, %v82
  %v84 = vrot.slane %v73, %v83
  %v86 = vunpack.c.l.s4 839922192
  %v87 = vunpack.c.0.s8 %v86
  %v88 = vlaneseq
  %v89 = vshrl.u32 %v88, 7
  %v90 = vsub.s32 %v87, %v89
  %v91 = vrot.slane %v75, %v90
  %v94 = vmul.f32 %v14, %v84
  %v95 = vmul.f32 %v15, %v91
  %96 = vst [vmem:[%s3] sm:$0xff] %v94
  %97 = vst [vmem:[%s3 + $0x8] sm:$0xff] %v95
  // Predicated region
  $region14: #{_se_layer_impl.1} parent=0 // pred_check
    _
  $region15: #{_se_layer_impl.1} parent=0 // pred_check_branch
    %99 = sbr.rel (0) target = $region17
  $region16: #{_se_layer_impl.1} parent=0 // pred_region
    _
  $region17: #{_se_layer_impl.1} parent=0 // pred_fallthru
    _
  // Predicated region
  $region18: #{_se_layer_impl.1} parent=0 // pred_check
    _
  $region19: #{_se_layer_impl.1} parent=0 // pred_check_branch
    %101 = sbr.rel (0) target = $region21
  $region20: #{_se_layer_impl.1} parent=0 // pred_region
    _
  $region21: #{_se_layer_impl.1} parent=0 // pred_fallthru
    _

</llo_original>
